<compile_context>
chip_gen: v7x
topology: tpu7x:2x2x1
jax: 0.10.0
libtpu: 0.0.40
codegen_flags: <defaults>
</compile_context>

<pallas_src>
import jax
import jax.numpy as jnp
from jax.experimental import pallas as pl
from jax.experimental.pallas import tpu as pltpu


def noise_injection_kernel(w_ref, x_ref, n_ref, o_ref):
    # w_ref: (1,)           scalar weight in SMEM
    # x_ref: (1, TC, HW)    feature tile in VMEM
    # n_ref: (1, 1, HW)     per-batch noise row in VMEM (shared across channels)
    # o_ref: (1, TC, HW)    output tile
    w = w_ref[0]
    o_ref[...] = x_ref[...] + w * n_ref[...]   # (1,1,HW) broadcasts over TC


def _channel_tile(C, HW, itemsize, budget_bytes=8 << 20):
    """Largest channel tile whose slab fits a per-buffer VMEM budget while
    satisfying Mosaic's sublane rule (multiple of 8, or the full channel dim)."""
    if C * HW * itemsize <= budget_bytes:
        return C
    for tc in range(C, 0, -1):
        if C % tc:
            continue
        if tc != C and tc % 8:
            continue
        if tc * HW * itemsize <= budget_bytes:
            return tc
    return C


def noise_injection(feature, weight, noise=None, *, key=None):
    """feature: (B, C, H, W); weight: scalar (or shape-(1,)) parameter.
    If noise is None it is drawn ~N(0,1) with shape (B, 1, H, W) (like the
    PyTorch module).  Returns feature + weight * noise (noise broadcast over C).
    """
    B, C, H, W = feature.shape
    HW = H * W
    dtype = feature.dtype

    if noise is None:
        if key is None:
            key = jax.random.PRNGKey(0)
        # TODO(synk): torch.randn RNG stream is not reproducible in JAX; we use
        # jax.random.normal with an explicit key instead.
        noise = jax.random.normal(key, (B, 1, H, W), dtype)

    x3 = feature.reshape(B, C, HW)
    n3 = noise.reshape(B, 1, HW).astype(dtype)
    w1 = jnp.asarray(weight, dtype).reshape(1)

    TC = _channel_tile(C, HW, jnp.dtype(dtype).itemsize)
    grid = (B, C // TC)

    out3 = pl.pallas_call(
        noise_injection_kernel,
        out_shape=jax.ShapeDtypeStruct((B, C, HW), dtype),
        grid=grid,
        in_specs=[
            pl.BlockSpec(memory_space=pltpu.MemorySpace.SMEM),        # weight (1,)
            pl.BlockSpec((1, TC, HW), lambda b, c: (b, c, 0)),        # feature tile
            pl.BlockSpec((1, 1, HW), lambda b, c: (b, 0, 0)),         # noise row
        ],
        out_specs=pl.BlockSpec((1, TC, HW), lambda b, c: (b, c, 0)),
        compiler_params=pltpu.CompilerParams(
            dimension_semantics=("parallel", "parallel")),
    )(w1, x3, n3)

    return out3.reshape(B, C, H, W)


if __name__ == "__main__":
    key = jax.random.PRNGKey(0)
    k_feat, k_noise = jax.random.split(key)

    # Small shapes consistent with the module: NCHW feature (B=2, C=4, 16x16).
    B, C, H, W = 2, 4, 16, 16
    feature = jax.random.normal(k_feat, (B, C, H, W), jnp.float32)
    noise = jax.random.normal(k_noise, (B, 1, H, W), jnp.float32)
    # nn.Parameter(torch.zeros(1)) starts at 0; use a nonzero value so the
    # noise path is actually exercised numerically.
    weight = jnp.asarray([0.37], jnp.float32)

    # Explicit-noise path (deterministic, so we can check against a reference).
    # NOTE: the original PyTorch forward returns None when noise is passed
    # explicitly (clearly unintended); we apply the injection instead.
    out = noise_injection(feature, weight, noise=noise)
    out = jax.block_until_ready(out)

    ref = feature + weight[0] * noise   # broadcasts over the channel axis
    assert out.shape == (B, C, H, W), out.shape
    assert jnp.allclose(out, ref, atol=1e-6, rtol=1e-6), float(
        jnp.max(jnp.abs(out - ref)))

    # Also exercise the noise-is-None path (in-wrapper RNG), just for coverage.
    out2 = jax.block_until_ready(
        noise_injection(feature, weight, key=jax.random.PRNGKey(1)))
    assert out2.shape == (B, C, H, W)

    print("KERNEL_OK")
</pallas_src>

<mosaic_0001>
module attributes {stable_mosaic.version = 11 : i64} {
  func.func @noise_injection_kernel(%arg0: i32, %arg1: i32, %arg2: memref<1xf32, #tpu.memory_space<smem>>, %arg3: memref<1x4x256xf32, #tpu.memory_space<vmem>>, %arg4: memref<1x1x256xf32, #tpu.memory_space<vmem>>, %arg5: memref<1x4x256xf32, #tpu.memory_space<vmem>>) attributes {dimension_semantics = [#tpu.dimension_semantics<parallel>, #tpu.dimension_semantics<parallel>], iteration_bounds = array<i64: 2, 1>, scalar_prefetch = 0 : i64, scratch_operands = 0 : i64, tpu.core_type = #tpu.core_type<tc>, window_params = [{transform_indices = @transform_0, window_bounds = array<i64: 1>}, {transform_indices = @transform_1, window_bounds = array<i64: 1, 4, 256>}, {transform_indices = @transform_2, window_bounds = array<i64: 1, 1, 256>}, {transform_indices = @transform_3, window_bounds = array<i64: 1, 4, 256>}]} {
    %c0 = arith.constant 0 : index
    %0 = memref.load %arg2[%c0] : memref<1xf32, #tpu.memory_space<smem>>
    %c0_0 = arith.constant 0 : index
    %c0_1 = arith.constant 0 : index
    %c0_2 = arith.constant 0 : index
    %1 = vector.load %arg3[%c0_0, %c0_1, %c0_2] : memref<1x4x256xf32, #tpu.memory_space<vmem>>, vector<1x4x256xf32>
    %c0_3 = arith.constant 0 : index
    %c0_4 = arith.constant 0 : index
    %c0_5 = arith.constant 0 : index
    %2 = vector.load %arg4[%c0_3, %c0_4, %c0_5] : memref<1x1x256xf32, #tpu.memory_space<vmem>>, vector<1x1x256xf32>
    %3 = vector.broadcast %0 : f32 to vector<1x1x256xf32>
    %4 = arith.mulf %3, %2 : vector<1x1x256xf32>
    %5 = vector.broadcast %4 : vector<1x1x256xf32> to vector<1x4x256xf32>
    %6 = arith.addf %1, %5 : vector<1x4x256xf32>
    %c0_6 = arith.constant 0 : index
    %c0_7 = arith.constant 0 : index
    %c0_8 = arith.constant 0 : index
    %7 = vector.load %arg5[%c0_6, %c0_7, %c0_8] : memref<1x4x256xf32, #tpu.memory_space<vmem>>, vector<1x4x256xf32>
    tpu.vector_store %arg5[%c0_6, %c0_7, %c0_8], %6 {strides = array<i32>} : memref<1x4x256xf32, #tpu.memory_space<vmem>>, vector<1x4x256xf32>,
    return
  }
  func.func @transform_0(%arg0: i32, %arg1: i32) -> i32 {
    %c0_i32 = arith.constant 0 : i32
    %c0_i32_0 = arith.constant 0 : i32
    return %c0_i32 : i32
  }
  func.func @transform_1(%arg0: i32, %arg1: i32) -> (i32, i32, i32) {
    %c0_i32 = arith.constant 0 : i32
    %c0_i32_0 = arith.constant 0 : i32
    return %arg0, %arg1, %c0_i32 : i32, i32, i32
  }
  func.func @transform_2(%arg0: i32, %arg1: i32) -> (i32, i32, i32) {
    %c0_i32 = arith.constant 0 : i32
    %c0_i32_0 = arith.constant 0 : i32
    %c0_i32_1 = arith.constant 0 : i32
    return %arg0, %c0_i32, %c0_i32_0 : i32, i32, i32
  }
  func.func @transform_3(%arg0: i32, %arg1: i32) -> (i32, i32, i32) {
    %c0_i32 = arith.constant 0 : i32
    %c0_i32_0 = arith.constant 0 : i32
    return %arg0, %arg1, %c0_i32 : i32, i32, i32
  }
}

</mosaic_0001>

<llo_original>
// kernel: tpu_custom_call.1
$region0: #{tpu_custom_call.1}
  #allocation0 [shape = 'u32[]', space=smem, size = 0x4, offset = 0x4, fixed_abs, tag = 'smem constant byte address 0x4 - core index']
  #allocation1 [shape = 'u32[144,128]{1,0:T(1,128)}', space=vmem, size = 0x12000, scoped, tag = 'internal scratch']
  #allocation2 [shape = 'f32[1]{0:T(128)S(6)}', space=smem, size = 0x200, scoped, tag = 'scoped memory for tpu_custom_call.1']
  %s0 = inlined_call_operand.<no memory space> [shape: f32[1], index: 0, kind: input, shape index: {}]
  %s1 = inlined_call_operand.hbm [shape: f32[2,4,256], index: 1, kind: input, shape index: {}]
  %s2 = inlined_call_operand.vmem [shape: f32[2,1,256], index: 2, kind: input, shape index: {}]
  %s3 = inlined_call_operand.hbm [shape: f32[2,4,256], index: 3, kind: output, shape index: {}]
  %s4 = sld [smem:[#allocation0]]
  $region49: #{tpu_custom_call.1} parent=0
    _
  %s6 = ssub.s32 1, %s4
  %s7 = scalar_select 0, %s6, %s4
  %8 = sst [smem:[#allocation2]] %s0
  $region1: #{tpu_custom_call.1} parent=0
    #allocation3 [shape = 'u8[8192]{0}', space=vmem, size = 0x2000, scoped, tag = 'input window, operand 1']
    #allocation4 [shape = 's32[2]{0}', space=sflag, size = 0x8, scoped, tag = 'scoped memory for tpu_custom_call.1']
    #allocation5 [shape = 's32[2]{0}', space=sflag, size = 0x8, scoped, tag = 'scoped memory for tpu_custom_call.1']
    #allocation6 [shape = 'u8[8192]{0}', space=vmem, size = 0x2000, scoped, tag = 'output window, operand 0']
    %9 = vsyncpa [#allocation4], 0
    %s10 = scalar_lea.sflag [#allocation4], 1
    %11 = vsyncpa %s10, 0
    %12 = vsyncpa [#allocation5], 0
    %s13 = scalar_lea.sflag [#allocation5], 1
    %14 = vsyncpa %s13, 0
    loop: start=0, step=1, limit=4
    $region2: #{tpu_custom_call.1} parent=1 // loop_pre_header
      _
    $region3: #{tpu_custom_call.1} parent=1 // loop_header
      %s16 = sphi 0, %s20
      %p17 = scmp.ge.s32.totalorder %s16, 4
      %s23 = sphi 0, %s35
      %s24 = sphi 0, %s31
      %s25 = sphi 0, %s23
      %s26 = sphi 0, %s24
      %s27 = sphi 0, %s25
      %s28 = sphi 0, %s26
      %s36 = sphi 0, %s36
      %s38 = sphi 0, %s36
      %s39 = sphi 0, %s38
      %s53 = sphi 0, %s39
      %s61 = sphi 0, %s63
      %s64 = sphi 0, %s61
      %s65 = sphi 0, %s64
      %s81 = sphi 0, %s65
      %s87 = sphi 0, %s89
      %s90 = sphi 0, %s87
      %s91 = sphi 0, %s90
      %s107 = sphi 0, %s91
      %s115 = sphi 0, %s117
      %s118 = sphi 0, %s115
      %s119 = sphi 0, %s118
      %s135 = sphi 0, %s119
    $region4: #{tpu_custom_call.1} parent=1 // loop_header_branch
      %19 = sbr.rel (%p17) target = $region8
    $region5: #{tpu_custom_call.1} parent=1 // loop_body
      %s21 = ssub.s32 %s16, 1
      %s22 = ssub.s32 %s16, 2
      %s29 = sadd.s32 1, %s24
      %p30 = scmp.ge.s32.totalorder %s29, 1
      %s31 = scalar_select %p30, 0, %s29
      %s32 = sadd.s32 1, %s23
      %s33 = scalar_select %p30, %s32, %s23
      %p34 = scmp.ge.s32.totalorder %s33, 2
      %s35 = scalar_select %p34, 0, %s33
      %s37 = sadd.s32 %s36, 1
      %p40 = scmp.eq.s32.totalorder %s16, 1
      %p41 = scmp.ne.s32.totalorder %s36, %s38
      %p42 = scmp.eq.s32.totalorder %s16, 0
      %p43 = por %p41, %p42
      %p44 = scmp.ne.s32.totalorder %s36, %s38
      %p45 = scmp.eq.s32.totalorder %s21, 1
      %p46 = por %p44, %p45
      %p47 = scmp.ne.s32.totalorder %s38, %s39
      %p48 = scmp.eq.s32.totalorder %s21, 0
      %p49 = por %p47, %p48
      %p50 = scmp.ne.s32.totalorder %s38, %s39
      %p51 = scmp.eq.s32.totalorder %s22, 1
      %p52 = por %p50, %p51
      %p54 = scmp.ne.s32.totalorder %s39, %s53
      %p55 = scmp.eq.s32.totalorder %s22, 0
      %p56 = por %p54, %p55
      %s57 = ssub.s32 %s23, %s35
      %s58 = ssub.s32 %s24, %s31
      %s59 = sor.u32 %s57, %s58
      %p60 = scmp.eq.s32.totalorder %s59, 0
      %s62 = sadd.s32 %s61, 1
      %s63 = scalar_select %p60, %s61, %s62
      %p66 = pneg %p60
      %p67 = scmp.eq.s32.totalorder %s16, 1
      %p68 = por %p66, %p67
      %p69 = scmp.ne.s32.totalorder %s61, %s64
      %p70 = scmp.eq.s32.totalorder %s16, 0
      %p71 = por %p69, %p70
      %p72 = scmp.ne.s32.totalorder %s61, %s64
      %p73 = scmp.eq.s32.totalorder %s21, 1
      %p74 = por %p72, %p73
      %p75 = scmp.ne.s32.totalorder %s64, %s65
      %p76 = scmp.eq.s32.totalorder %s21, 0
      %p77 = por %p75, %p76
      %p78 = scmp.ne.s32.totalorder %s64, %s65
      %p79 = scmp.eq.s32.totalorder %s22, 1
      %p80 = por %p78, %p79
      %p82 = scmp.ne.s32.totalorder %s65, %s81
      %p83 = scmp.eq.s32.totalorder %s22, 0
      %p84 = por %p82, %p83
      %s85 = ssub.s32 %s23, %s35
      %p86 = scmp.eq.s32.totalorder %s85, 0
      %s88 = sadd.s32 %s87, 1
      %s89 = scalar_select %p86, %s87, %s88
      %p92 = pneg %p86
      %p93 = scmp.eq.s32.totalorder %s16, 1
      %p94 = por %p92, %p93
      %p95 = scmp.ne.s32.totalorder %s87, %s90
      %p96 = scmp.eq.s32.totalorder %s16, 0
      %p97 = por %p95, %p96
      %p98 = scmp.ne.s32.totalorder %s87, %s90
      %p99 = scmp.eq.s32.totalorder %s21, 1
      %p100 = por %p98, %p99
      %p101 = scmp.ne.s32.totalorder %s90, %s91
      %p102 = scmp.eq.s32.totalorder %s21, 0
      %p103 = por %p101, %p102
      %p104 = scmp.ne.s32.totalorder %s90, %s91
      %p105 = scmp.eq.s32.totalorder %s22, 1
      %p106 = por %p104, %p105
      %p108 = scmp.ne.s32.totalorder %s91, %s107
      %p109 = scmp.eq.s32.totalorder %s22, 0
      %p110 = por %p108, %p109
      %s111 = ssub.s32 %s23, %s35
      %s112 = ssub.s32 %s24, %s31
      %s113 = sor.u32 %s111, %s112
      %p114 = scmp.eq.s32.totalorder %s113, 0
      %s116 = sadd.s32 %s115, 1
      %s117 = scalar_select %p114, %s115, %s116
      %p120 = pneg %p114
      %p121 = scmp.eq.s32.totalorder %s16, 1
      %p122 = por %p120, %p121
      %p123 = scmp.ne.s32.totalorder %s115, %s118
      %p124 = scmp.eq.s32.totalorder %s16, 0
      %p125 = por %p123, %p124
      %p126 = scmp.ne.s32.totalorder %s115, %s118
      %p127 = scmp.eq.s32.totalorder %s21, 1
      %p128 = por %p126, %p127
      %p129 = scmp.ne.s32.totalorder %s118, %s119
      %p130 = scmp.eq.s32.totalorder %s21, 0
      %p131 = por %p129, %p130
      %p132 = scmp.ne.s32.totalorder %s118, %s119
      %p133 = scmp.eq.s32.totalorder %s22, 1
      %p134 = por %p132, %p133
      %p136 = scmp.ne.s32.totalorder %s119, %s135
      %p137 = scmp.eq.s32.totalorder %s22, 0
      %p138 = por %p136, %p137
      %p139 = scmp.le.s32.totalorder 1, %s16
      %p140 = scmp.lt.s32.totalorder %s16, 3
      %p141 = pnand %p139, %p140
      %p142 = pneg %p141
      // Predicated region
      $region9: #{tpu_custom_call.1} parent=5 // pred_check
        _
      $region10: #{tpu_custom_call.1} parent=5 // pred_check_branch
        %144 = sbr.rel (%p141) target = $region12
      $region11: #{tpu_custom_call.1} parent=5 // pred_region
        %s145 = ssub.s32 %s16, 1
        // Predicated region
        $region13: #{tpu_custom_call.1} parent=11 // pred_check
          %p146 = pneg %p49
        $region14: #{tpu_custom_call.1} parent=11 // pred_check_branch
          %148 = sbr.rel (%p146) target = $region16
        $region15: #{tpu_custom_call.1} parent=11 // pred_region
          _
        $region16: #{tpu_custom_call.1} parent=11 // pred_fallthru
          _
      $region12: #{tpu_custom_call.1} parent=5 // pred_fallthru
        _
      %p149 = scmp.lt.s32.totalorder %s16, 2
      // Predicated region
      $region17: #{tpu_custom_call.1} parent=5 // pred_check
        %p150 = pneg %p149
      $region18: #{tpu_custom_call.1} parent=5 // pred_check_branch
        %152 = sbr.rel (%p150) target = $region20
      $region19: #{tpu_custom_call.1} parent=5 // pred_region
        // Predicated region
        $region21: #{tpu_custom_call.1} parent=19 // pred_check
          %p153 = pneg %p71
        $region22: #{tpu_custom_call.1} parent=19 // pred_check_branch
          %155 = sbr.rel (%p153) target = $region24
        $region23: #{tpu_custom_call.1} parent=19 // pred_region
          %s156 = sand.u32 %s61, 1
          %s157 = scalar_lea.sflag [#allocation4], %s156
          %s158 = sand.u32 %s61, 1
          %s159 = smul.addr %s158, 8
          %s160 = scalar_lea.vmem [#allocation3], %s159
          %s162 = ssub.s32 128, 128
          %163 = vsyncadd %s157, %s162
          %s164 = smul.addr %s24, 2
          %s165 = smul.addr %s23, 2
          %s166 = sadd.s32 %s164, %s165
          %s167 = smul.addr %s166, 64
          %s168 = scalar_lea.hbm %s1, %s167
          %s170 = sshll.u32 %s160, 4
          %s171 = int_to_ptr.vmem [resolvable:$true] %s170
          %173 = dma.hbm_to_vmem [thread:$0]  %s168, 128, %s171, %s157
        $region24: #{tpu_custom_call.1} parent=19 // pred_fallthru
          _
        // Predicated region
        $region25: #{tpu_custom_call.1} parent=19 // pred_check
          %p174 = pneg %p97
        $region26: #{tpu_custom_call.1} parent=19 // pred_check_branch
          %176 = sbr.rel (%p174) target = $region28
        $region27: #{tpu_custom_call.1} parent=19 // pred_region
          %p177 = scmp.lt.s32.totalorder %s23, 1
          %s178 = scalar_select %p177, %s23, 1
          %s179 = smul.addr %s178, 2
          %s180 = scalar_lea.vmem %s2, %s179
        $region28: #{tpu_custom_call.1} parent=19 // pred_fallthru
          _
      $region20: #{tpu_custom_call.1} parent=5 // pred_fallthru
        _
      %p181 = scmp.le.s32.totalorder 1, %s16
      %p182 = scmp.lt.s32.totalorder %s16, 3
      %p183 = pnand %p181, %p182
      %p184 = pneg %p183
      // Predicated region
      $region29: #{tpu_custom_call.1} parent=5 // pred_check
        _
      $region30: #{tpu_custom_call.1} parent=5 // pred_check_branch
        %186 = sbr.rel (%p183) target = $region32
      $region31: #{tpu_custom_call.1} parent=5 // pred_region
        %s187 = ssub.s32 %s16, 1
        %s188 = sand.u32 %s64, 1
        %s189 = scalar_lea.sflag [#allocation4], %s188
        %s190 = sand.u32 %s64, 1
        %s191 = smul.addr %s190, 8
        %s192 = scalar_lea.vmem [#allocation3], %s191
        // Predicated region
        $region33: #{tpu_custom_call.1} parent=31 // pred_check
          %p193 = pneg %p77
        $region34: #{tpu_custom_call.1} parent=31 // pred_check_branch
          %195 = sbr.rel (%p193) target = $region36
        $region35: #{tpu_custom_call.1} parent=31 // pred_region
          %196 = dma.done %s189, 128
        $region36: #{tpu_custom_call.1} parent=31 // pred_fallthru
          _
        %p197 = pneg %p49
        %p198 = pneg %p46
        %s199 = sand.u32 %s64, 1
        %s200 = scalar_lea.sflag [#allocation4], %s199
        %s201 = sand.u32 %s64, 1
        %s202 = smul.addr %s201, 8
        %s203 = scalar_lea.vmem [#allocation3], %s202
        %p204 = pneg %p77
        %p205 = pneg %p74
        %p206 = scmp.lt.s32.totalorder %s25, 1
        %s207 = scalar_select %p206, %s25, 1
        %s208 = smul.addr %s207, 2
        %s209 = scalar_lea.vmem %s2, %s208
        %p210 = pneg %p103
        %p211 = pneg %p100
        %p212 = pneg %p131
        %p213 = pneg %p128
        %s214 = sand.u32 %s118, 1
        %s215 = scalar_lea.sflag [#allocation5], %s214
        %s216 = sand.u32 %s118, 1
        %s217 = smul.addr %s216, 8
        %s218 = scalar_lea.vmem [#allocation6], %s217
        %p219 = scmp.lt.s32.totalorder %s25, 1
        %s220 = scalar_select %p219, %s25, 1
        %s221 = smul.addr %s220, 2
        %s222 = scalar_lea.vmem %s2, %s221
        %s223 = sld [smem:[#allocation2]]
        %v224 = vld [vmem:[%s192] sm:$0xff]
        %v225 = vld [vmem:[%s222] sm:$0x3]
        %v226 = vstv %s223
        %v227 = vmul.f32 %v226, %v225
        %v229 = vlaneseq
        %v230 = vshrl.u32 %v229, 7
        %v231 = vsub.s32 0, %v230
        %v232 = vrot.slane %v227, %v231
        %v233 = vlaneseq
        %v234 = vshrl.u32 %v233, 7
        %v235 = vsub.s32 1, %v234
        %v236 = vrot.slane %v227, %v235
        %v237 = vcombine.low %v232, %v236
        %v239 = vadd.f32 %v224, %v237
        %240 = vst [vmem:[%s218] sm:$0xff] %v239
        %s241 = sand.u32 %s118, 1
        %s242 = scalar_lea.sflag [#allocation5], %s241
        %s243 = sand.u32 %s118, 1
        %s244 = smul.addr %s243, 8
        %s245 = scalar_lea.vmem [#allocation6], %s244
        // Predicated region
        $region37: #{tpu_custom_call.1} parent=31 // pred_check
          %p246 = pneg %p128
        $region38: #{tpu_custom_call.1} parent=31 // pred_check_branch
          %248 = sbr.rel (%p246) target = $region40
        $region39: #{tpu_custom_call.1} parent=31 // pred_region
          %s250 = ssub.s32 128, 128
          %251 = vsyncadd %s242, %s250
          %s252 = smul.addr %s26, 2
          %s253 = smul.addr %s25, 2
          %s254 = sadd.s32 %s252, %s253
          %s255 = smul.addr %s254, 64
          %s256 = scalar_lea.hbm %s3, %s255
          %s258 = sshll.u32 %s245, 4
          %s259 = int_to_ptr.vmem [resolvable:$true] %s258
          %261 = dma.vmem_to_hbm [thread:$0]  %s259, 128, %s256, %s242
        $region40: #{tpu_custom_call.1} parent=31 // pred_fallthru
          _
      $region32: #{tpu_custom_call.1} parent=5 // pred_fallthru
        _
      %p262 = scmp.le.s32.totalorder 2, %s16
      // Predicated region
      $region41: #{tpu_custom_call.1} parent=5 // pred_check
        %p263 = pneg %p262
      $region42: #{tpu_custom_call.1} parent=5 // pred_check_branch
        %265 = sbr.rel (%p263) target = $region44
      $region43: #{tpu_custom_call.1} parent=5 // pred_region
        %s266 = ssub.s32 %s16, 2
        // Predicated region
        $region45: #{tpu_custom_call.1} parent=43 // pred_check
          %p267 = pneg %p134
        $region46: #{tpu_custom_call.1} parent=43 // pred_check_branch
          %269 = sbr.rel (%p267) target = $region48
        $region47: #{tpu_custom_call.1} parent=43 // pred_region
          %s270 = sand.u32 %s119, 1
          %s271 = scalar_lea.sflag [#allocation5], %s270
          %s272 = sand.u32 %s119, 1
          %s273 = smul.addr %s272, 8
          %s274 = scalar_lea.vmem [#allocation6], %s273
          %275 = dma.done %s271, 128
        $region48: #{tpu_custom_call.1} parent=43 // pred_fallthru
          _
      $region44: #{tpu_custom_call.1} parent=5 // pred_fallthru
        _
    $region6: #{tpu_custom_call.1} parent=1 // loop_footer
      %s20 = sadd.s32 1, %s16
    $region7: #{tpu_custom_call.1} parent=1 // loop_footer_branch
      %15 = sbr.rel target = $region3
    $region8: #{tpu_custom_call.1} parent=1 // loop_exit
      _
    %276 = vsyncpa [#allocation4], 1
    %s277 = scalar_lea.sflag [#allocation4], 1
    %278 = vsyncpa %s277, 1
    %279 = vsyncpa [#allocation5], 1
    %s280 = scalar_lea.sflag [#allocation5], 1
    %281 = vsyncpa %s280, 1

</llo_original>
